<compile_context>
chip_gen: v6e
topology: v6e:2x2x1
jax: 0.10.0
libtpu: 0.0.40
codegen_flags: <defaults>
</compile_context>

<pallas_src>
import functools

import jax
import jax.numpy as jnp
from jax import lax
from jax.experimental import pallas as pl
from jax.experimental.pallas import tpu as pltpu


def _gcl_kernel(epoch_ref, img_ref, txt_ref,
                old_bI_ref, old_bT_ref, old_sI_ref, old_sT_ref,
                loss_ref, new_bI_ref, new_bT_ref, new_sI_ref, new_sT_ref,
                *, gamma, temperature, eps):
    img = img_ref[...]                                   # (B, D) native dtype
    txt = txt_ref[...]                                   # (B, D) native dtype
    B = img.shape[0]
    inv_t = 1.0 / temperature
    dims = (((1,), (1,)), ((), ()))                      # contract last dims, no batch

    # Diagonal <img_i, txt_i> computed elementwise in f32 (O(B*D)), shared by both
    # paths; replaces two masked (B,B) reductions.
    img32 = img.astype(jnp.float32)
    txt32 = txt.astype(jnp.float32)
    diag = jnp.sum(img32 * txt32, axis=-1, keepdims=True)        # (B, 1)

    # Shared boolean diagonal mask (iota+compare once); used only to zero the
    # diagonal of the exp matrices so g / weights match the reference exactly.
    row = lax.broadcasted_iota(jnp.int32, (B, B), 0)
    col = lax.broadcasted_iota(jnp.int32, (B, B), 1)
    diag_mask = row == col

    is_epoch0 = epoch_ref[0] == 0

    def one_side(anchor, other, old_b, old_s):
        # sim rows = "anchor" samples, columns = "other" samples; all reductions
        # are lane-major (axis=-1).
        sim = lax.dot_general(anchor, other, dims,
                              preferred_element_type=jnp.float32)     # (B, B)
        d_t = (sim - diag) * inv_t                                    # diffs / T
        b_new = jnp.maximum(jnp.max(d_t, axis=-1, keepdims=True), old_b)   # (B,1)
        exp_d = jnp.where(diag_mask, 0.0, jnp.exp(d_t - b_new))      # masked exps
        g = jnp.sum(exp_d, axis=-1, keepdims=True)                   # (B, 1)
        s_upd = (1.0 - gamma) * old_s * jnp.exp(old_b - b_new) + gamma * g
        s_new = jnp.where(is_epoch0, g, s_upd)
        # Hoisted divide: B reciprocals instead of B^2 broadcast divides.
        # (approx=True routes to the EUP and is worthwhile at large B.)
        inv_s = pl.reciprocal(s_new + eps, approx=False)             # (B, 1)
        contrib = jnp.sum((exp_d * inv_s) * d_t)                     # scalar
        return b_new, s_new, contrib

    # Image path: rows = images (sim = img @ txt^T).
    bI_new, sI_new, img_contrib = one_side(img, txt, old_bI_ref[...], old_sI_ref[...])
    # Text path: rows = texts (sim^T = txt @ img^T) -> lane-major text reductions.
    bT_new, sT_new, txt_contrib = one_side(txt, img, old_bT_ref[...], old_sT_ref[...])

    # loss = mean_i sum_j w_img*image_diffs + mean_j sum_i w_txt*text_diffs
    #      = (T / B) * (sum(w_img * img_d_t) + sum(w_txt * txt_d_t))
    loss_ref[0, 0] = (temperature / B) * (img_contrib + txt_contrib)

    new_bI_ref[...] = bI_new
    new_bT_ref[...] = bT_new
    new_sI_ref[...] = sI_new
    new_sT_ref[...] = sT_new


def gcl_forward_pallas(image_features, text_features,
                       old_b_I, old_b_T, old_s_I, old_s_T, epoch,
                       *, gamma, temperature, eps):
    B, D = image_features.shape
    kernel = functools.partial(_gcl_kernel, gamma=gamma,
                               temperature=temperature, eps=eps)
    smem = pl.BlockSpec(memory_space=pltpu.SMEM)
    vmem = pl.BlockSpec(memory_space=pltpu.VMEM)
    out_shapes = (
        jax.ShapeDtypeStruct((1, 1), jnp.float32),    # loss
        jax.ShapeDtypeStruct((B, 1), jnp.float32),    # new b_I (gathered)
        jax.ShapeDtypeStruct((B, 1), jnp.float32),    # new b_T (gathered)
        jax.ShapeDtypeStruct((B, 1), jnp.float32),    # new s_I (gathered)
        jax.ShapeDtypeStruct((B, 1), jnp.float32),    # new s_T (gathered)
    )
    feat_bytes = 2 * B * D * image_features.dtype.itemsize
    state_bytes = 8 * B * 4
    cost = pl.CostEstimate(
        flops=int(2 * (2 * B * B * D) + 16 * B * B),
        transcendentals=int(2 * B * B + 6 * B),
        bytes_accessed=int(feat_bytes + state_bytes + 4 * B * 4 + 8),
    )
    loss, nbI, nbT, nsI, nsT = pl.pallas_call(
        kernel,
        out_shape=out_shapes,
        in_specs=[smem, vmem, vmem, vmem, vmem, vmem, vmem],
        out_specs=(smem, vmem, vmem, vmem, vmem),
        compiler_params=pltpu.CompilerParams(vmem_limit_bytes=32 * 1024 * 1024),
        cost_estimate=cost,
    )(
        jnp.asarray([epoch], jnp.int32),
        image_features,                      # native dtype -> MXU directly
        text_features,                       # native dtype -> MXU directly
        old_b_I.reshape(B, 1).astype(jnp.float32),
        old_b_T.reshape(B, 1).astype(jnp.float32),
        old_s_I.reshape(B, 1).astype(jnp.float32),
        old_s_T.reshape(B, 1).astype(jnp.float32),
    )
    return (loss[0, 0], nbI.reshape(B), nbT.reshape(B),
            nsI.reshape(B), nsT.reshape(B))


class GCLLossPallas:
    """Stateful wrapper mirroring GCL_Loss (world_size == 1)."""

    def __init__(self, N_I, N_T, gamma=0.1, temperature=0.07, bsz=128):
        self.gamma = float(gamma)
        self.temperature = float(temperature)
        self.eps = 1e-10
        self.bsz = bsz
        self.s_I = jnp.zeros((N_I,), jnp.float32)
        self.s_T = jnp.zeros((N_T,), jnp.float32)
        self.b_I = jnp.zeros((N_I,), jnp.float32)
        self.b_T = jnp.zeros((N_T,), jnp.float32)

    def __call__(self, image_features, text_features, image_ids, text_ids, epoch):
        old_b_I = self.b_I[image_ids]
        old_b_T = self.b_T[text_ids]
        old_s_I = self.s_I[image_ids]
        old_s_T = self.s_T[text_ids]
        loss, nbI, nbT, nsI, nsT = gcl_forward_pallas(
            image_features, text_features, old_b_I, old_b_T, old_s_I, old_s_T,
            epoch, gamma=self.gamma, temperature=self.temperature, eps=self.eps)
        self.b_I = self.b_I.at[image_ids].set(nbI)
        self.b_T = self.b_T.at[text_ids].set(nbT)
        self.s_I = self.s_I.at[image_ids].set(nsI)
        self.s_T = self.s_T.at[text_ids].set(nsT)
        return loss


# ----------------------- pure-JAX reference (for checking) -----------------------
class GCLLossRef:
    def __init__(self, N_I, N_T, gamma=0.1, temperature=0.07, bsz=128):
        self.gamma = float(gamma)
        self.temperature = float(temperature)
        self.eps = 1e-10
        self.s_I = jnp.zeros((N_I,), jnp.float32)
        self.s_T = jnp.zeros((N_T,), jnp.float32)
        self.b_I = jnp.zeros((N_I,), jnp.float32)
        self.b_T = jnp.zeros((N_T,), jnp.float32)

    def __call__(self, img, txt, image_ids, text_ids, epoch):
        img = img.astype(jnp.float32)
        txt = txt.astype(jnp.float32)
        sim = jnp.einsum('id,jd->ij', img, txt, preferred_element_type=jnp.float32)
        diag = jnp.diagonal(sim)
        B = sim.shape[0]
        image_diffs = sim - diag[:, None]
        text_diffs = sim - diag[None, :]
        idt = image_diffs / self.temperature
        tdt = text_diffs / self.temperature
        old_b_I = self.b_I[image_ids]
        new_b_I = jnp.max(jnp.maximum(idt, old_b_I[:, None]), axis=1)
        old_b_T = self.b_T[text_ids]
        new_b_T = jnp.max(jnp.maximum(tdt, old_b_T[None, :]), axis=0)
        mask = 1.0 - jnp.eye(B, dtype=jnp.float32)
        exp_i = jnp.exp(idt - new_b_I[:, None]) * mask
        exp_t = jnp.exp(tdt - new_b_T[None, :]) * mask
        g_I = exp_i.sum(1)
        g_T = exp_t.sum(0)
        if epoch == 0:
            s_I, s_T = g_I, g_T
        else:
            s_I = ((1 - self.gamma) * self.s_I[image_ids]
                   * jnp.exp(old_b_I - new_b_I) + self.gamma * g_I)
            s_T = ((1 - self.gamma) * self.s_T[text_ids]
                   * jnp.exp(old_b_T - new_b_T) + self.gamma * g_T)
        self.b_I = self.b_I.at[image_ids].set(new_b_I)
        self.b_T = self.b_T.at[text_ids].set(new_b_T)
        self.s_I = self.s_I.at[image_ids].set(s_I)
        self.s_T = self.s_T.at[text_ids].set(s_T)
        w_i = exp_i / (s_I[:, None] + self.eps)
        w_t = exp_t / (s_T[None, :] + self.eps)
        return (jnp.sum(w_i * image_diffs, axis=1).mean()
                + jnp.sum(w_t * text_diffs, axis=0).mean())


if __name__ == "__main__":
    B, D = 8, 32          # batch (== bsz, world_size 1), feature dim
    N_I, N_T = 64, 64     # dataset sizes for the running state

    key = jax.random.PRNGKey(0)
    k1, k2, k3, k4 = jax.random.split(key, 4)

    def make_feats(k):
        x = jax.random.normal(k, (B, D), jnp.float32)
        x = x / jnp.linalg.norm(x, axis=-1, keepdims=True)   # L2-normalized (CLIP-style)
        return x.astype(jnp.bfloat16)                        # native bf16 into the kernel

    img0, txt0, img1, txt1 = (make_feats(k) for k in (k1, k2, k3, k4))
    image_ids = jnp.arange(B, dtype=jnp.int32) + 3
    text_ids = jnp.arange(B, dtype=jnp.int32) + 11

    mod = GCLLossPallas(N_I, N_T, gamma=0.1, temperature=0.07, bsz=B)
    ref = GCLLossRef(N_I, N_T, gamma=0.1, temperature=0.07, bsz=B)

    # epoch 0 step (initializes s_I / s_T), then epoch 1 step (moving-average path)
    l0 = mod(img0, txt0, image_ids, text_ids, epoch=0)
    r0 = ref(img0, txt0, image_ids, text_ids, epoch=0)
    l1 = mod(img1, txt1, image_ids, text_ids, epoch=1)
    r1 = ref(img1, txt1, image_ids, text_ids, epoch=1)

    jax.block_until_ready((l0, l1, mod.b_I, mod.b_T, mod.s_I, mod.s_T))

    assert jnp.allclose(l0, r0, rtol=1e-4, atol=1e-4), (l0, r0)
    assert jnp.allclose(l1, r1, rtol=1e-4, atol=1e-4), (l1, r1)
    assert jnp.allclose(mod.b_I, ref.b_I, rtol=1e-4, atol=1e-4)
    assert jnp.allclose(mod.b_T, ref.b_T, rtol=1e-4, atol=1e-4)
    assert jnp.allclose(mod.s_I, ref.s_I, rtol=1e-4, atol=1e-4)
    assert jnp.allclose(mod.s_T, ref.s_T, rtol=1e-4, atol=1e-4)

    print("KERNEL_OK")
</pallas_src>

<mosaic_0001>
module attributes {stable_mosaic.version = 11 : i64} {
  func.func @_gcl_kernel(%arg0: memref<1xi32, #tpu.memory_space<smem>>, %arg1: memref<8x32xbf16, #tpu.memory_space<vmem>>, %arg2: memref<8x32xbf16, #tpu.memory_space<vmem>>, %arg3: memref<8x1xf32, #tpu.memory_space<vmem>>, %arg4: memref<8x1xf32, #tpu.memory_space<vmem>>, %arg5: memref<8x1xf32, #tpu.memory_space<vmem>>, %arg6: memref<8x1xf32, #tpu.memory_space<vmem>>, %arg7: memref<1x1xf32, #tpu.memory_space<smem>>, %arg8: memref<8x1xf32, #tpu.memory_space<vmem>>, %arg9: memref<8x1xf32, #tpu.memory_space<vmem>>, %arg10: memref<8x1xf32, #tpu.memory_space<vmem>>, %arg11: memref<8x1xf32, #tpu.memory_space<vmem>>) attributes {dimension_semantics = [], scalar_prefetch = 0 : i64, scratch_operands = 0 : i64, tpu.core_type = #tpu.core_type<tc>} {
    %c0 = arith.constant 0 : index
    %c0_0 = arith.constant 0 : index
    %0 = vector.load %arg1[%c0, %c0_0] : memref<8x32xbf16, #tpu.memory_space<vmem>>, vector<8x32xbf16>
    %c0_1 = arith.constant 0 : index
    %c0_2 = arith.constant 0 : index
    %1 = vector.load %arg2[%c0_1, %c0_2] : memref<8x32xbf16, #tpu.memory_space<vmem>>, vector<8x32xbf16>
    %2 = arith.extf %0 : vector<8x32xbf16> to vector<8x32xf32>
    %3 = arith.extf %1 : vector<8x32xbf16> to vector<8x32xf32>
    %4 = arith.mulf %2, %3 : vector<8x32xf32>
    %cst = arith.constant dense<0.000000e+00> : vector<8xf32>
    %5 = vector.multi_reduction <add>, %4, %cst [1] : vector<8x32xf32> to vector<8xf32>
    %6 = vector.shape_cast %5 : vector<8xf32> to vector<8x1xf32>
    %7 = tpu.iota {dimensions = array<i32: 0>} : vector<8x8xi32>
    %8 = tpu.iota {dimensions = array<i32: 1>} : vector<8x8xi32>
    %9 = arith.cmpi eq, %7, %8 : vector<8x8xi32>
    %c0_3 = arith.constant 0 : index
    %10 = memref.load %arg0[%c0_3] : memref<1xi32, #tpu.memory_space<smem>>
    %c0_i32 = arith.constant 0 : i32
    %11 = arith.cmpi eq, %10, %c0_i32 : i32
    %c0_4 = arith.constant 0 : index
    %c0_5 = arith.constant 0 : index
    %12 = vector.load %arg3[%c0_4, %c0_5] : memref<8x1xf32, #tpu.memory_space<vmem>>, vector<8x1xf32>
    %c0_6 = arith.constant 0 : index
    %c0_7 = arith.constant 0 : index
    %13 = vector.load %arg5[%c0_6, %c0_7] : memref<8x1xf32, #tpu.memory_space<vmem>>, vector<8x1xf32>
    %cst_8 = arith.constant dense<0.000000e+00> : vector<8x8xf32>
    %14 = tpu.matmul %0, %1, %cst_8 {dimension_numbers = #tpu.dot_dimension_numbers<[1], [1], [0], [0], [0, 0, 1, 0], [], []>} : vector<8x32xbf16>, vector<8x32xbf16>, vector<8x8xf32> -> vector<8x8xf32>
    %15 = vector.broadcast %6 : vector<8x1xf32> to vector<8x8xf32>
    %16 = arith.subf %14, %15 : vector<8x8xf32>
    %cst_9 = arith.constant 14.2857141 : f32
    %17 = vector.broadcast %cst_9 : f32 to vector<8x8xf32>
    %18 = arith.mulf %16, %17 : vector<8x8xf32>
    %cst_10 = arith.constant dense<0xFF800000> : vector<8xf32>
    %19 = vector.multi_reduction <maximumf>, %18, %cst_10 [1] : vector<8x8xf32> to vector<8xf32>
    %20 = vector.shape_cast %19 : vector<8xf32> to vector<8x1xf32>
    %21 = arith.maximumf %20, %12 : vector<8x1xf32>
    %22 = vector.broadcast %21 : vector<8x1xf32> to vector<8x8xf32>
    %23 = arith.subf %18, %22 : vector<8x8xf32>
    %24 = math.exp %23 : vector<8x8xf32>
    %cst_11 = arith.constant 0.000000e+00 : f32
    %25 = vector.broadcast %cst_11 : f32 to vector<8x8xf32>
    %26 = arith.select %9, %25, %24 : vector<8x8xi1>, vector<8x8xf32>
    %cst_12 = arith.constant dense<0.000000e+00> : vector<8xf32>
    %27 = vector.multi_reduction <add>, %26, %cst_12 [1] : vector<8x8xf32> to vector<8xf32>
    %28 = vector.shape_cast %27 : vector<8xf32> to vector<8x1xf32>
    %cst_13 = arith.constant 0.899999976 : f32
    %29 = vector.broadcast %cst_13 : f32 to vector<8x1xf32>
    %30 = arith.mulf %29, %13 : vector<8x1xf32>
    %31 = arith.subf %12, %21 : vector<8x1xf32>
    %32 = math.exp %31 : vector<8x1xf32>
    %33 = arith.mulf %30, %32 : vector<8x1xf32>
    %cst_14 = arith.constant 1.000000e-01 : f32
    %34 = vector.broadcast %cst_14 : f32 to vector<8x1xf32>
    %35 = arith.mulf %34, %28 : vector<8x1xf32>
    %36 = arith.addf %33, %35 : vector<8x1xf32>
    %37 = arith.select %11, %28, %36 : vector<8x1xf32>
    %cst_15 = arith.constant 1.000000e-10 : f32
    %38 = vector.broadcast %cst_15 : f32 to vector<8x1xf32>
    %39 = arith.addf %37, %38 : vector<8x1xf32>
    %40 = tpu.reciprocal %39 : vector<8x1xf32> -> vector<8x1xf32>
    %41 = vector.broadcast %40 : vector<8x1xf32> to vector<8x8xf32>
    %42 = arith.mulf %26, %41 : vector<8x8xf32>
    %43 = arith.mulf %42, %18 : vector<8x8xf32>
    %44 = vector.shape_cast %43 : vector<8x8xf32> to vector<1x8x8xf32>
    %cst_16 = arith.constant dense<0.000000e+00> : vector<1xf32>
    %45 = vector.multi_reduction <add>, %44, %cst_16 [1, 2] : vector<1x8x8xf32> to vector<1xf32>
    %46 = vector.shape_cast %45 : vector<1xf32> to vector<1x1x1xf32>
    %47 = vector.extract %46[0, 0, 0] : f32 from vector<1x1x1xf32>
    %c0_17 = arith.constant 0 : index
    %c0_18 = arith.constant 0 : index
    %48 = vector.load %arg4[%c0_17, %c0_18] : memref<8x1xf32, #tpu.memory_space<vmem>>, vector<8x1xf32>
    %c0_19 = arith.constant 0 : index
    %c0_20 = arith.constant 0 : index
    %49 = vector.load %arg6[%c0_19, %c0_20] : memref<8x1xf32, #tpu.memory_space<vmem>>, vector<8x1xf32>
    %cst_21 = arith.constant dense<0.000000e+00> : vector<8x8xf32>
    %50 = tpu.matmul %1, %0, %cst_21 {dimension_numbers = #tpu.dot_dimension_numbers<[1], [1], [0], [0], [0, 0, 1, 0], [], []>} : vector<8x32xbf16>, vector<8x32xbf16>, vector<8x8xf32> -> vector<8x8xf32>
    %51 = vector.broadcast %6 : vector<8x1xf32> to vector<8x8xf32>
    %52 = arith.subf %50, %51 : vector<8x8xf32>
    %cst_22 = arith.constant 14.2857141 : f32
    %53 = vector.broadcast %cst_22 : f32 to vector<8x8xf32>
    %54 = arith.mulf %52, %53 : vector<8x8xf32>
    %cst_23 = arith.constant dense<0xFF800000> : vector<8xf32>
    %55 = vector.multi_reduction <maximumf>, %54, %cst_23 [1] : vector<8x8xf32> to vector<8xf32>
    %56 = vector.shape_cast %55 : vector<8xf32> to vector<8x1xf32>
    %57 = arith.maximumf %56, %48 : vector<8x1xf32>
    %58 = vector.broadcast %57 : vector<8x1xf32> to vector<8x8xf32>
    %59 = arith.subf %54, %58 : vector<8x8xf32>
    %60 = math.exp %59 : vector<8x8xf32>
    %cst_24 = arith.constant 0.000000e+00 : f32
    %61 = vector.broadcast %cst_24 : f32 to vector<8x8xf32>
    %62 = arith.select %9, %61, %60 : vector<8x8xi1>, vector<8x8xf32>
    %cst_25 = arith.constant dense<0.000000e+00> : vector<8xf32>
    %63 = vector.multi_reduction <add>, %62, %cst_25 [1] : vector<8x8xf32> to vector<8xf32>
    %64 = vector.shape_cast %63 : vector<8xf32> to vector<8x1xf32>
    %cst_26 = arith.constant 0.899999976 : f32
    %65 = vector.broadcast %cst_26 : f32 to vector<8x1xf32>
    %66 = arith.mulf %65, %49 : vector<8x1xf32>
    %67 = arith.subf %48, %57 : vector<8x1xf32>
    %68 = math.exp %67 : vector<8x1xf32>
    %69 = arith.mulf %66, %68 : vector<8x1xf32>
    %cst_27 = arith.constant 1.000000e-01 : f32
    %70 = vector.broadcast %cst_27 : f32 to vector<8x1xf32>
    %71 = arith.mulf %70, %64 : vector<8x1xf32>
    %72 = arith.addf %69, %71 : vector<8x1xf32>
    %73 = arith.select %11, %64, %72 : vector<8x1xf32>
    %cst_28 = arith.constant 1.000000e-10 : f32
    %74 = vector.broadcast %cst_28 : f32 to vector<8x1xf32>
    %75 = arith.addf %73, %74 : vector<8x1xf32>
    %76 = tpu.reciprocal %75 : vector<8x1xf32> -> vector<8x1xf32>
    %77 = vector.broadcast %76 : vector<8x1xf32> to vector<8x8xf32>
    %78 = arith.mulf %62, %77 : vector<8x8xf32>
    %79 = arith.mulf %78, %54 : vector<8x8xf32>
    %80 = vector.shape_cast %79 : vector<8x8xf32> to vector<1x8x8xf32>
    %cst_29 = arith.constant dense<0.000000e+00> : vector<1xf32>
    %81 = vector.multi_reduction <add>, %80, %cst_29 [1, 2] : vector<1x8x8xf32> to vector<1xf32>
    %82 = vector.shape_cast %81 : vector<1xf32> to vector<1x1x1xf32>
    %83 = vector.extract %82[0, 0, 0] : f32 from vector<1x1x1xf32>
    %84 = arith.addf %47, %83 : f32
    %cst_30 = arith.constant 8.750000e-03 : f32
    %85 = arith.mulf %cst_30, %84 : f32
    %c0_31 = arith.constant 0 : index
    %c0_32 = arith.constant 0 : index
    %86 = memref.load %arg7[%c0_31, %c0_32] : memref<1x1xf32, #tpu.memory_space<smem>>
    memref.store %85, %arg7[%c0_31, %c0_32] : memref<1x1xf32, #tpu.memory_space<smem>>
    %c0_33 = arith.constant 0 : index
    %c0_34 = arith.constant 0 : index
    %87 = vector.load %arg8[%c0_33, %c0_34] : memref<8x1xf32, #tpu.memory_space<vmem>>, vector<8x1xf32>
    tpu.vector_store %arg8[%c0_33, %c0_34], %21 {strides = array<i32>} : memref<8x1xf32, #tpu.memory_space<vmem>>, vector<8x1xf32>,
    %c0_35 = arith.constant 0 : index
    %c0_36 = arith.constant 0 : index
    %88 = vector.load %arg9[%c0_35, %c0_36] : memref<8x1xf32, #tpu.memory_space<vmem>>, vector<8x1xf32>
    tpu.vector_store %arg9[%c0_35, %c0_36], %57 {strides = array<i32>} : memref<8x1xf32, #tpu.memory_space<vmem>>, vector<8x1xf32>,
    %c0_37 = arith.constant 0 : index
    %c0_38 = arith.constant 0 : index
    %89 = vector.load %arg10[%c0_37, %c0_38] : memref<8x1xf32, #tpu.memory_space<vmem>>, vector<8x1xf32>
    tpu.vector_store %arg10[%c0_37, %c0_38], %37 {strides = array<i32>} : memref<8x1xf32, #tpu.memory_space<vmem>>, vector<8x1xf32>,
    %c0_39 = arith.constant 0 : index
    %c0_40 = arith.constant 0 : index
    %90 = vector.load %arg11[%c0_39, %c0_40] : memref<8x1xf32, #tpu.memory_space<vmem>>, vector<8x1xf32>
    tpu.vector_store %arg11[%c0_39, %c0_40], %73 {strides = array<i32>} : memref<8x1xf32, #tpu.memory_space<vmem>>, vector<8x1xf32>,
    return
  }
}

</mosaic_0001>

<llo_original>
// kernel: tpu_custom_call.1
$region0: #{tpu_custom_call.1}
  #allocation0 [shape = 'u32[]', space=smem, size = 0x4, offset = 0x4, fixed_abs, tag = 'smem constant byte address 0x4 - core index']
  #allocation1 [shape = 'u32[144,128]{1,0:T(1,128)}', space=vmem, size = 0x12000, scoped, tag = 'internal scratch']
  #allocation2 [shape = 's32[1]{0:T(128)S(6)}', space=smem, size = 0x200, scoped, tag = 'scoped memory for tpu_custom_call.1']
  %s0 = inlined_call_operand.<no memory space> [shape: s32[1], index: 0, kind: input, shape index: {}]
  %s1 = inlined_call_operand.vmem [shape: bf16[8,32], index: 1, kind: input, shape index: {}]
  %s2 = inlined_call_operand.vmem [shape: bf16[8,32], index: 2, kind: input, shape index: {}]
  %s3 = inlined_call_operand.vmem [shape: f32[8,1], index: 3, kind: input, shape index: {}]
  %s4 = inlined_call_operand.vmem [shape: f32[8,1], index: 4, kind: input, shape index: {}]
  %s5 = inlined_call_operand.vmem [shape: f32[8,1], index: 5, kind: input, shape index: {}]
  %s6 = inlined_call_operand.vmem [shape: f32[8,1], index: 6, kind: input, shape index: {}]
  %s7 = inlined_call_operand.hbm [shape: f32[1,1], index: 7, kind: output, shape index: {0}]
  %s8 = inlined_call_operand.vmem [shape: f32[8,1], index: 8, kind: output, shape index: {1}]
  %s9 = inlined_call_operand.vmem [shape: f32[8,1], index: 9, kind: output, shape index: {2}]
  %s10 = inlined_call_operand.vmem [shape: f32[8,1], index: 10, kind: output, shape index: {3}]
  %s11 = inlined_call_operand.vmem [shape: f32[8,1], index: 11, kind: output, shape index: {4}]
  %12 = xla_tuple %s7, %s8, %s9, %s10, %s11
  %s13 = sld [smem:[#allocation0]]
  $region70: #{tpu_custom_call.1} parent=0
    _
  %s15 = ssub.s32 1, %s13
  %s16 = scalar_select 0, %s15, %s13
  %17 = sst [smem:[#allocation2]] %s0
  $region1: #{tpu_custom_call.1} parent=0
    #allocation3 [shape = 'u8[512]{0}', space=smem, size = 0x200, scoped, tag = 'output window, operand 0, single buffered']
    #allocation4 [shape = 's32[1]{0}', space=sflag, size = 0x4, scoped, tag = 'scoped memory for tpu_custom_call.1']
    %18 = vsyncpa [#allocation4], 0
    // Predicated region
    $region2: #{tpu_custom_call.1} parent=1 // pred_check
      _
    $region3: #{tpu_custom_call.1} parent=1 // pred_check_branch
      %20 = sbr.rel (0) target = $region5
    $region4: #{tpu_custom_call.1} parent=1 // pred_region
      _
    $region5: #{tpu_custom_call.1} parent=1 // pred_fallthru
      _
    // Predicated region
    $region6: #{tpu_custom_call.1} parent=1 // pred_check
      _
    $region7: #{tpu_custom_call.1} parent=1 // pred_check_branch
      %22 = sbr.rel (0) target = $region9
    $region8: #{tpu_custom_call.1} parent=1 // pred_region
      _
    $region9: #{tpu_custom_call.1} parent=1 // pred_fallthru
      _
    // Predicated region
    $region10: #{tpu_custom_call.1} parent=1 // pred_check
      _
    $region11: #{tpu_custom_call.1} parent=1 // pred_check_branch
      %24 = sbr.rel (0) target = $region13
    $region12: #{tpu_custom_call.1} parent=1 // pred_region
      _
    $region13: #{tpu_custom_call.1} parent=1 // pred_fallthru
      _
    // Predicated region
    $region14: #{tpu_custom_call.1} parent=1 // pred_check
      _
    $region15: #{tpu_custom_call.1} parent=1 // pred_check_branch
      %26 = sbr.rel (0) target = $region17
    $region16: #{tpu_custom_call.1} parent=1 // pred_region
      _
    $region17: #{tpu_custom_call.1} parent=1 // pred_fallthru
      _
    // Predicated region
    $region18: #{tpu_custom_call.1} parent=1 // pred_check
      _
    $region19: #{tpu_custom_call.1} parent=1 // pred_check_branch
      %28 = sbr.rel (0) target = $region21
    $region20: #{tpu_custom_call.1} parent=1 // pred_region
      _
    $region21: #{tpu_custom_call.1} parent=1 // pred_fallthru
      _
    // Predicated region
    $region22: #{tpu_custom_call.1} parent=1 // pred_check
      _
    $region23: #{tpu_custom_call.1} parent=1 // pred_check_branch
      %30 = sbr.rel (0) target = $region25
    $region24: #{tpu_custom_call.1} parent=1 // pred_region
      _
    $region25: #{tpu_custom_call.1} parent=1 // pred_fallthru
      _
    // Predicated region
    $region26: #{tpu_custom_call.1} parent=1 // pred_check
      _
    $region27: #{tpu_custom_call.1} parent=1 // pred_check_branch
      %32 = sbr.rel (0) target = $region29
    $region28: #{tpu_custom_call.1} parent=1 // pred_region
      _
    $region29: #{tpu_custom_call.1} parent=1 // pred_fallthru
      _
    %v34 = vld [vmem:[%s1] sm:$0xf]
    %v35 = vld [vmem:[%s2] sm:$0xf]
    %v36 = vunpack.c.l.bf16 %v34
    %v37 = vunpack.c.l.bf16 %v35
    %v38 = vmul.f32 %v36, %v37
    %vm39 = vcmask 261120
    %v40 = vsel %vm39, %v38, 0.0
    %41 = vadd.xlane.f32.xlu0 %v40
    %v42 = vpop.xlane.xlu0 %41
    %v43 = vlaneseq
    %v44 = vshrl.u32 %v43, 7
    %v45 = vlaneseq
    %v46 = vand.u32 %v45, 127
    %vm47 = vcmp.eq.s32.totalorder %v44, %v46
    %s48 = sld [smem:[#allocation2]]
    %p49 = scmp.eq.s32.totalorder %s48, 0
    %v50 = vld [vmem:[%s3] sm:$0xff]
    %v51 = vld [vmem:[%s5] sm:$0xff]
    %v53 = vsel %vm39, %v34, 0
    %v56 = vsel %vm39, %v35, 0
    %58 = vmatprep.subr.bf16.mxu0 0
    %59 = vmatpush1.bf16.xpose.msra.mxu0 0
    %60 = vmatprep.subr.bf16.mxu0 0
    %61 = vmatpush1.bf16.xpose.msra.mxu0 0
    %62 = vmatprep.subr.bf16.mxu0 0
    %63 = vmatpush1.bf16.xpose.msra.mxu0 0
    %64 = vmatprep.subr.bf16.mxu0 0
    %65 = vmatpush1.bf16.xpose.msra.mxu0 0
    %66 = vmatprep.subr.bf16.mxu0 0
    %67 = vmatpush1.bf16.xpose.msra.mxu0 0
    %68 = vmatprep.subr.bf16.mxu0 0
    %69 = vmatpush1.bf16.xpose.msra.mxu0 0
    %70 = vmatprep.subr.bf16.mxu0 0
    %71 = vmatpush1.bf16.xpose.msra.mxu0 0
    %72 = vmatprep.subr.bf16.mxu0 0
    %73 = vmatpush1.bf16.xpose.msra.mxu0 %v56
    %74 = vmatprep.subr.bf16.mxu0 0
    %75 = vmatpush2.bf16.xpose.msra.mxu0 0
    %76 = vmatprep.subr.bf16.mxu0 0
    %77 = vmatpush2.bf16.xpose.msra.mxu0 0
    %78 = vmatprep.subr.bf16.mxu0 0
    %79 = vmatpush2.bf16.xpose.msra.mxu0 0
    %80 = vmatprep.subr.bf16.mxu0 0
    %81 = vmatpush2.bf16.xpose.msra.mxu0 0
    %82 = vmatprep.subr.bf16.mxu0 0
    %83 = vmatpush2.bf16.xpose.msra.mxu0 0
    %84 = vmatprep.subr.bf16.mxu0 0
    %85 = vmatpush2.bf16.xpose.msra.mxu0 0
    %86 = vmatprep.subr.bf16.mxu0 0
    %87 = vmatpush2.bf16.xpose.msra.mxu0 0
    %88 = vmatprep.subr.bf16.mxu0 0
    %89 = vmatpush2.bf16.xpose.msra.mxu0 0
    %90 = vmatprep.mubr.bf16.mxu0 0
    %91 = vmatmul.mubr.bf16.gmra.mxu0 %v53
    %v92 = vpop.f32.mrf.mxu0
    %v93 = vadd.f32 0.0, %v92
    %v94 = vpop.f32.mrf.mxu0
    %v95 = vpop.f32.mrf.mxu0
    %v96 = vpop.f32.mrf.mxu0
    %97 = vdwg.mxu0
    %v98 = vsub.f32 %v93, %v42
    %v99 = vmul.f32 %v98, 14.285714
    %vm100 = vcmask 64512
    %v101 = vsel %vm100, %v99, -inf
    %102 = vmax.xlane.f32.xlu0 %v101
    %v103 = vpop.xlane.xlu0 %102
    %v104 = vmax.f32 %v103, %v50
    %106 = vset.pattern.permute.xlu0 0
    %107 = vperm.xlu0 %106, %v104
    %v108 = vpop.permute.xlu0 %107
    %v110 = vsub.f32 %v99, %v108
    %v111 = vmul.f32 %v110, 1.442695
    %v112 = vpow.pop %v111
    %v113 = vsel %vm47, 0.0, %v112
    %v114 = vsel %vm100, %v113, 0.0
    %115 = vadd.xlane.f32.xlu0 %v114
    %v116 = vpop.xlane.xlu0 %115
    %v117 = vmul.f32 %v51, 0.9
    %v118 = vsub.f32 %v50, %v104
    %v119 = vmul.f32 %v118, 1.442695
    %v120 = vpow.pop %v119
    %v121 = vmul.f32 %v117, %v120
    %v122 = vmul.f32 %v116, 0.1
    %v123 = vadd.f32 %v121, %v122
    %s124 = scalar_select %p49, 1, 0
    %v125 = vstv %s124
    %vm126 = vcmp.eq.s32.totalorder %v125, 1
    %v127 = vsel %vm126, %v116, %v123
    %v128 = vadd.f32 %v127, 1e-10
    %v129 = vrcp.pop %v128
    %131 = vset.pattern.permute.xlu0 0
    %132 = vperm.xlu0 %131, %v129
    %v133 = vpop.permute.xlu0 %132
    %v135 = vmul.f32 %v113, %v133
    %v136 = vmul.f32 %v135, %v99
    %v137 = vsel %vm100, %v136, 0.0
    %138 = vadd.xlane.f32.xlu0 %v137
    %v139 = vpop.xlane.xlu0 %138
    %v140 = vrot.slane %v139, 4
    %v141 = vadd.f32 %v139, %v140
    %v142 = vrot.slane %v141, 2
    %v143 = vadd.f32 %v141, %v142
    %v144 = vrot.slane %v143, 1
    %v145 = vadd.f32 %v143, %v144
    %s146 = vtos %v145
    %v147 = vld [vmem:[%s4] sm:$0xff]
    %v148 = vld [vmem:[%s6] sm:$0xff]
    %149 = vmatprep.subr.bf16.mxu0 0
    %150 = vmatpush1.bf16.xpose.msra.mxu0 0
    %151 = vmatprep.subr.bf16.mxu0 0
    %152 = vmatpush1.bf16.xpose.msra.mxu0 0
    %153 = vmatprep.subr.bf16.mxu0 0
    %154 = vmatpush1.bf16.xpose.msra.mxu0 0
    %155 = vmatprep.subr.bf16.mxu0 0
    %156 = vmatpush1.bf16.xpose.msra.mxu0 0
    %157 = vmatprep.subr.bf16.mxu0 0
    %158 = vmatpush1.bf16.xpose.msra.mxu0 0
    %159 = vmatprep.subr.bf16.mxu0 0
    %160 = vmatpush1.bf16.xpose.msra.mxu0 0
    %161 = vmatprep.subr.bf16.mxu0 0
    %162 = vmatpush1.bf16.xpose.msra.mxu0 0
    %163 = vmatprep.subr.bf16.mxu0 0
    %164 = vmatpush1.bf16.xpose.msra.mxu0 %v53
    %165 = vmatprep.subr.bf16.mxu0 0
    %166 = vmatpush2.bf16.xpose.msra.mxu0 0
    %167 = vmatprep.subr.bf16.mxu0 0
    %168 = vmatpush2.bf16.xpose.msra.mxu0 0
    %169 = vmatprep.subr.bf16.mxu0 0
    %170 = vmatpush2.bf16.xpose.msra.mxu0 0
    %171 = vmatprep.subr.bf16.mxu0 0
    %172 = vmatpush2.bf16.xpose.msra.mxu0 0
    %173 = vmatprep.subr.bf16.mxu0 0
    %174 = vmatpush2.bf16.xpose.msra.mxu0 0
    %175 = vmatprep.subr.bf16.mxu0 0
    %176 = vmatpush2.bf16.xpose.msra.mxu0 0
    %177 = vmatprep.subr.bf16.mxu0 0
    %178 = vmatpush2.bf16.xpose.msra.mxu0 0
    %179 = vmatprep.subr.bf16.mxu0 0
    %180 = vmatpush2.bf16.xpose.msra.mxu0 0
    %181 = vmatprep.mubr.bf16.mxu0 0
    %182 = vmatmul.mubr.bf16.gmra.mxu0 %v56
    %v183 = vpop.f32.mrf.mxu0
    %v184 = vadd.f32 0.0, %v183
    %v185 = vpop.f32.mrf.mxu0
    %v186 = vpop.f32.mrf.mxu0
    %v187 = vpop.f32.mrf.mxu0
    %188 = vdwg.mxu0
    %v189 = vsub.f32 %v184, %v42
    %v190 = vmul.f32 %v189, 14.285714
    %v191 = vsel %vm100, %v190, -inf
    %192 = vmax.xlane.f32.xlu0 %v191
    %v193 = vpop.xlane.xlu0 %192
    %v194 = vmax.f32 %v193, %v147
    %196 = vset.pattern.permute.xlu0 0
    %197 = vperm.xlu0 %196, %v194
    %v198 = vpop.permute.xlu0 %197
    %v200 = vsub.f32 %v190, %v198
    %v201 = vmul.f32 %v200, 1.442695
    %v202 = vpow.pop %v201
    %v203 = vsel %vm47, 0.0, %v202
    %v204 = vsel %vm100, %v203, 0.0
    %205 = vadd.xlane.f32.xlu0 %v204
    %v206 = vpop.xlane.xlu0 %205
    %v207 = vmul.f32 %v148, 0.9
    %v208 = vsub.f32 %v147, %v194
    %v209 = vmul.f32 %v208, 1.442695
    %v210 = vpow.pop %v209
    %v211 = vmul.f32 %v207, %v210
    %v212 = vmul.f32 %v206, 0.1
    %v213 = vadd.f32 %v211, %v212
    %v214 = vsel %vm126, %v206, %v213
    %v215 = vadd.f32 %v214, 1e-10
    %v216 = vrcp.pop %v215
    %218 = vset.pattern.permute.xlu0 0
    %219 = vperm.xlu0 %218, %v216
    %v220 = vpop.permute.xlu0 %219
    %v222 = vmul.f32 %v203, %v220
    %v223 = vmul.f32 %v222, %v190
    %v224 = vsel %vm100, %v223, 0.0
    %225 = vadd.xlane.f32.xlu0 %v224
    %v226 = vpop.xlane.xlu0 %225
    %v227 = vrot.slane %v226, 4
    %v228 = vadd.f32 %v226, %v227
    %v229 = vrot.slane %v228, 2
    %v230 = vadd.f32 %v228, %v229
    %v231 = vrot.slane %v230, 1
    %v232 = vadd.f32 %v230, %v231
    %s233 = vtos %v232
    %s234 = sadd.f32 %s146, %s233
    %s235 = smul.f32 %s234, 0.00875
    %s236 = scalar_lea.smem [#allocation3], 0
    %237 = sst [smem:[%s236]] %s235
    %vm238 = vcmask 7168
    %239 = vst.msk [vmem:[%s8] sm:$0xff] %vm238, %v104
    %240 = vst.msk [vmem:[%s9] sm:$0xff] %vm238, %v194
    %241 = vst.msk [vmem:[%s10] sm:$0xff] %vm238, %v127
    %242 = vst.msk [vmem:[%s11] sm:$0xff] %vm238, %v214
    // Predicated region
    $region30: #{tpu_custom_call.1} parent=1 // pred_check
      _
    $region31: #{tpu_custom_call.1} parent=1 // pred_check_branch
      %244 = sbr.rel (0) target = $region33
    $region32: #{tpu_custom_call.1} parent=1 // pred_region
      %s246 = ssub.s32 16, 16
      %247 = vsyncadd [#allocation4], %s246
      %250 = dma.smem_to_hbm [#allocation3], 16, %s7, [#allocation4]
    $region33: #{tpu_custom_call.1} parent=1 // pred_fallthru
      _
    // Predicated region
    $region34: #{tpu_custom_call.1} parent=1 // pred_check
      _
    $region35: #{tpu_custom_call.1} parent=1 // pred_check_branch
      %252 = sbr.rel (0) target = $region37
    $region36: #{tpu_custom_call.1} parent=1 // pred_region
      _
    $region37: #{tpu_custom_call.1} parent=1 // pred_fallthru
      _
    // Predicated region
    $region38: #{tpu_custom_call.1} parent=1 // pred_check
      _
    $region39: #{tpu_custom_call.1} parent=1 // pred_check_branch
      %254 = sbr.rel (0) target = $region41
    $region40: #{tpu_custom_call.1} parent=1 // pred_region
      _
    $region41: #{tpu_custom_call.1} parent=1 // pred_fallthru
      _
    // Predicated region
    $region42: #{tpu_custom_call.1} parent=1 // pred_check
      _
    $region43: #{tpu_custom_call.1} parent=1 // pred_check_branch
      %256 = sbr.rel (0) target = $region45
    $region44: #{tpu_custom_call.1} parent=1 // pred_region
      _
    $region45: #{tpu_custom_call.1} parent=1 // pred_fallthru
      _
    // Predicated region
    $region46: #{tpu_custom_call.1} parent=1 // pred_check
      _
    $region47: #{tpu_custom_call.1} parent=1 // pred_check_branch
      %258 = sbr.rel (0) target = $region49
    $region48: #{tpu_custom_call.1} parent=1 // pred_region
      _
    $region49: #{tpu_custom_call.1} parent=1 // pred_fallthru
      _
    // Predicated region
    $region50: #{tpu_custom_call.1} parent=1 // pred_check
      _
    $region51: #{tpu_custom_call.1} parent=1 // pred_check_branch
      %260 = sbr.rel (0) target = $region53
    $region52: #{tpu_custom_call.1} parent=1 // pred_region
      %261 = dma.done [#allocation4], 16
    $region53: #{tpu_custom_call.1} parent=1 // pred_fallthru
      _
    // Predicated region
    $region54: #{tpu_custom_call.1} parent=1 // pred_check
      _
    $region55: #{tpu_custom_call.1} parent=1 // pred_check_branch
      %263 = sbr.rel (0) target = $region57
    $region56: #{tpu_custom_call.1} parent=1 // pred_region
      _
    $region57: #{tpu_custom_call.1} parent=1 // pred_fallthru
      _
    // Predicated region
    $region58: #{tpu_custom_call.1} parent=1 // pred_check
      _
    $region59: #{tpu_custom_call.1} parent=1 // pred_check_branch
      %265 = sbr.rel (0) target = $region61
    $region60: #{tpu_custom_call.1} parent=1 // pred_region
      _
    $region61: #{tpu_custom_call.1} parent=1 // pred_fallthru
      _
    // Predicated region
    $region62: #{tpu_custom_call.1} parent=1 // pred_check
      _
    $region63: #{tpu_custom_call.1} parent=1 // pred_check_branch
      %267 = sbr.rel (0) target = $region65
    $region64: #{tpu_custom_call.1} parent=1 // pred_region
      _
    $region65: #{tpu_custom_call.1} parent=1 // pred_fallthru
      _
    // Predicated region
    $region66: #{tpu_custom_call.1} parent=1 // pred_check
      _
    $region67: #{tpu_custom_call.1} parent=1 // pred_check_branch
      %269 = sbr.rel (0) target = $region69
    $region68: #{tpu_custom_call.1} parent=1 // pred_region
      _
    $region69: #{tpu_custom_call.1} parent=1 // pred_fallthru
      _
    %270 = sfence
    %271 = vsyncpa [#allocation4], 1

</llo_original>
